<compile_context>
chip_gen: v5e
topology: v5e:2x2
jax: 0.10.0
libtpu: 0.0.40
codegen_flags: <defaults>
</compile_context>

<pallas_src>
import functools

import jax
import jax.numpy as jnp
from jax import lax
from jax.experimental import pallas as pl
from jax.experimental.pallas import tpu as pltpu

EPS = 1e-5


def _bn_relu(acc, gamma, beta):
    """Training-mode BatchNorm (biased batch variance, centered) + ReLU.

    acc:   (C, L) f32 conv output over the FULL batch (L = N*H*W)
    gamma: (C, 1) f32
    beta:  (C, 1) f32
    """
    mean = jnp.mean(acc, axis=1, keepdims=True)                 # (C, 1)
    centered = acc - mean
    var = jnp.mean(centered * centered, axis=1, keepdims=True)  # biased batch var
    scale = gamma * lax.rsqrt(var + EPS)                        # (C, 1)
    return jnp.maximum(centered * scale + beta, 0.0)            # (C, L)


def _double_conv_kernel(p1_ref, m_ref, w1_ref, w2_ref,
                        g1_ref, b1_ref, g2_ref, b2_ref, o_ref, *, h, w):
    """Whole DoubleConvLayer in one invocation (everything resident in VMEM).

    p1_ref : (9*Cin,  L) bf16  lane-dense im2col patches of the input, L = N*H*W
    m_ref  : (9,      L) f32   per-tap boundary-validity masks (0/1) for stage 2
    w1_ref : (Cout, 9*Cin)  bf16  packed stage-1 weights, K = (ky*3+kx)*Cin + ci
    w2_ref : (Cout, 9*Cout) bf16  packed stage-2 weights, K = (ky*3+kx)*Cout + ci
    g*_ref, b*_ref : (Cout, 1) f32  BatchNorm gamma / beta per stage
    o_ref  : (Cout, L) f32   final output (lane-dense)
    """
    total = p1_ref.shape[1]

    # ---- stage 1: one MXU matmul (K = 9*Cin, 512 lanes) + BN + ReLU ----------
    acc1 = jnp.dot(w1_ref[...], p1_ref[...],
                   preferred_element_type=jnp.float32)           # (Cout, L) f32
    y1 = _bn_relu(acc1, g1_ref[...], b1_ref[...])                # stays in VMEM

    # ---- stage 2: lane-dense in-kernel im2col via pltpu.roll + masks ---------
    # tap (dy, dx): tap[p] = y1[p + dy*W + dx]  (np.roll semantics => shift = -s),
    # with out-of-image reads zeroed by the precomputed boundary masks.
    taps = []
    idx = 0
    for dy in (-1, 0, 1):
        for dx in (-1, 0, 1):
            shift = (-(dy * w + dx)) % total
            t = y1 if shift == 0 else pltpu.roll(y1, shift, axis=1)
            if dy != 0 or dx != 0:
                t = t * m_ref[idx:idx + 1, :]                    # (1, L) bcast
            taps.append(t)
            idx += 1
    patches2 = jnp.concatenate(taps, axis=0).astype(jnp.bfloat16)  # (9*Cout, L)

    acc2 = jnp.dot(w2_ref[...], patches2,
                   preferred_element_type=jnp.float32)           # (Cout, L) f32
    o_ref[...] = _bn_relu(acc2, g2_ref[...], b2_ref[...])


# --------------------------------- wrapper ----------------------------------
def _pack_weights(w_oihw):
    """(Cout, Cin, 3, 3) -> (Cout, 9*Cin) bf16, K index = (ky*3+kx)*Cin + ci."""
    cout, cin = w_oihw.shape[0], w_oihw.shape[1]
    return (jnp.transpose(w_oihw, (0, 2, 3, 1))
            .reshape(cout, 9 * cin).astype(jnp.bfloat16))


def _im2col_nchw(x_nchw):
    """(N, Cin, H, W) -> lane-dense (9*Cin, N*H*W) patches, tap-major K."""
    n, cin, h, w = x_nchw.shape
    xpad = jnp.pad(x_nchw, ((0, 0), (0, 0), (1, 1), (1, 1)))
    taps = [xpad[:, :, ky:ky + h, kx:kx + w]                      # (N, Cin, H, W)
            for ky in range(3) for kx in range(3)]
    p = jnp.stack(taps, axis=0)                                   # (9, N, Cin, H, W)
    p = p.transpose(0, 2, 1, 3, 4)                                # (9, Cin, N, H, W)
    return p.reshape(9 * cin, n * h * w)


def _tap_masks(n, h, w):
    """(9, N*H*W) f32 validity masks (1 inside the image, 0 at the halo)."""
    hh = jnp.arange(h)
    ww = jnp.arange(w)
    masks = []
    for dy in (-1, 0, 1):
        mh = (hh + dy >= 0) & (hh + dy <= h - 1)                  # (H,)
        for dx in (-1, 0, 1):
            mw = (ww + dx >= 0) & (ww + dx <= w - 1)              # (W,)
            m = mh[:, None] & mw[None, :]                         # (H, W)
            m = jnp.broadcast_to(m[None], (n, h, w)).reshape(-1)  # (N*H*W,)
            masks.append(m)
    return jnp.stack(masks, axis=0).astype(jnp.float32)


def double_conv_layer(x_nchw, params):
    """DoubleConvLayer forward.  Input/output in PyTorch NCHW layout."""
    n, cin, h, w = x_nchw.shape
    cout = params["w1"].shape[0]
    total = n * h * w

    patches1 = _im2col_nchw(x_nchw).astype(jnp.bfloat16)          # (9*Cin, L)
    masks = _tap_masks(n, h, w)                                   # (9, L)
    w1p = _pack_weights(params["w1"])                             # (Cout, 9*Cin)
    w2p = _pack_weights(params["w2"])                             # (Cout, 9*Cout)
    g1 = params["g1"].reshape(cout, 1).astype(jnp.float32)
    beta1 = params["beta1"].reshape(cout, 1).astype(jnp.float32)
    g2 = params["g2"].reshape(cout, 1).astype(jnp.float32)
    beta2 = params["beta2"].reshape(cout, 1).astype(jnp.float32)
    # NOTE: conv biases b1/b2 are intentionally NOT passed to the kernel — a bias
    # added before training-mode BatchNorm cancels exactly in the forward pass.

    kernel = functools.partial(_double_conv_kernel, h=h, w=w)

    out_flat = pl.pallas_call(
        kernel,
        grid=(1,),
        in_specs=[
            pl.BlockSpec((9 * cin, total), lambda i: (0, 0)),
            pl.BlockSpec((9, total), lambda i: (0, 0)),
            pl.BlockSpec((cout, 9 * cin), lambda i: (0, 0)),
            pl.BlockSpec((cout, 9 * cout), lambda i: (0, 0)),
            pl.BlockSpec((cout, 1), lambda i: (0, 0)),
            pl.BlockSpec((cout, 1), lambda i: (0, 0)),
            pl.BlockSpec((cout, 1), lambda i: (0, 0)),
            pl.BlockSpec((cout, 1), lambda i: (0, 0)),
        ],
        out_specs=pl.BlockSpec((cout, total), lambda i: (0, 0)),
        out_shape=jax.ShapeDtypeStruct((cout, total), jnp.float32),
        compiler_params=pltpu.CompilerParams(
            dimension_semantics=("arbitrary",)),
    )(patches1, masks, w1p, w2p, g1, beta1, g2, beta2)

    # (Cout, N*H*W) -> (N, Cout, H, W)
    return out_flat.reshape(cout, n, h, w).transpose(1, 0, 2, 3)


# ----------------------------- pure-JAX reference -----------------------------
def _ref_stage(x_nchw, w, b, g, beta):
    y = lax.conv_general_dilated(
        x_nchw, w, window_strides=(1, 1), padding="SAME",
        dimension_numbers=("NCHW", "OIHW", "NCHW"),
        precision=lax.Precision.HIGHEST,
    ) + b[None, :, None, None]
    mean = jnp.mean(y, axis=(0, 2, 3), keepdims=True)
    var = jnp.mean((y - mean) ** 2, axis=(0, 2, 3), keepdims=True)
    y = (y - mean) * lax.rsqrt(var + EPS) * g[None, :, None, None] \
        + beta[None, :, None, None]
    return jnp.maximum(y, 0.0)


def double_conv_ref(x_nchw, p):
    y = _ref_stage(x_nchw, p["w1"], p["b1"], p["g1"], p["beta1"])
    return _ref_stage(y, p["w2"], p["b2"], p["g2"], p["beta2"])


# ------------------------------------ main ------------------------------------
if __name__ == "__main__":
    N, Cin, Cout, H, W = 2, 4, 8, 16, 16
    key = jax.random.PRNGKey(0)
    keys = jax.random.split(key, 9)

    def snap(a):
        # Snap test data to bf16-representable values so the bf16-MXU kernel can
        # be compared against the f32 reference with a tight tolerance.
        return a.astype(jnp.bfloat16).astype(jnp.float32)

    x = snap(jax.random.normal(keys[0], (N, Cin, H, W), jnp.float32))
    params = {
        "w1": snap(jax.random.normal(keys[1], (Cout, Cin, 3, 3), jnp.float32) * 0.2),
        "b1": jax.random.normal(keys[2], (Cout,), jnp.float32) * 0.1,
        "g1": 1.0 + 0.1 * jax.random.normal(keys[3], (Cout,), jnp.float32),
        "beta1": 0.1 * jax.random.normal(keys[4], (Cout,), jnp.float32),
        "w2": snap(jax.random.normal(keys[5], (Cout, Cout, 3, 3), jnp.float32) * 0.2),
        "b2": jax.random.normal(keys[6], (Cout,), jnp.float32) * 0.1,
        "g2": 1.0 + 0.1 * jax.random.normal(keys[7], (Cout,), jnp.float32),
        "beta2": 0.1 * jax.random.normal(keys[8], (Cout,), jnp.float32),
    }

    out = jax.block_until_ready(double_conv_layer(x, params))
    ref = jax.block_until_ready(double_conv_ref(x, params))

    assert out.shape == (N, Cout, H, W), out.shape
    max_err = float(jnp.max(jnp.abs(out - ref)))
    assert jnp.allclose(out, ref, rtol=3e-2, atol=3e-2), f"max abs err {max_err}"
    print("KERNEL_OK")
</pallas_src>

<mosaic_0001>
module attributes {stable_mosaic.version = 11 : i64} {
  func.func @_double_conv_kernel(%arg0: i32, %arg1: memref<36x512xbf16, #tpu.memory_space<vmem>>, %arg2: memref<9x512xf32, #tpu.memory_space<vmem>>, %arg3: memref<8x36xbf16, #tpu.memory_space<vmem>>, %arg4: memref<8x72xbf16, #tpu.memory_space<vmem>>, %arg5: memref<8x1xf32, #tpu.memory_space<vmem>>, %arg6: memref<8x1xf32, #tpu.memory_space<vmem>>, %arg7: memref<8x1xf32, #tpu.memory_space<vmem>>, %arg8: memref<8x1xf32, #tpu.memory_space<vmem>>, %arg9: memref<8x512xf32, #tpu.memory_space<vmem>>) attributes {dimension_semantics = [#tpu.dimension_semantics<arbitrary>], iteration_bounds = array<i64: 1>, scalar_prefetch = 0 : i64, scratch_operands = 0 : i64, tpu.core_type = #tpu.core_type<tc>, window_params = [{pipeline_mode = #tpu.pipeline_mode<synchronous>, transform_indices = @transform_0, window_bounds = array<i64: 36, 512>}, {pipeline_mode = #tpu.pipeline_mode<synchronous>, transform_indices = @transform_1, window_bounds = array<i64: 9, 512>}, {pipeline_mode = #tpu.pipeline_mode<synchronous>, transform_indices = @transform_2, window_bounds = array<i64: 8, 36>}, {pipeline_mode = #tpu.pipeline_mode<synchronous>, transform_indices = @transform_3, window_bounds = array<i64: 8, 72>}, {pipeline_mode = #tpu.pipeline_mode<synchronous>, transform_indices = @transform_4, window_bounds = array<i64: 8, 1>}, {pipeline_mode = #tpu.pipeline_mode<synchronous>, transform_indices = @transform_5, window_bounds = array<i64: 8, 1>}, {pipeline_mode = #tpu.pipeline_mode<synchronous>, transform_indices = @transform_6, window_bounds = array<i64: 8, 1>}, {pipeline_mode = #tpu.pipeline_mode<synchronous>, transform_indices = @transform_7, window_bounds = array<i64: 8, 1>}, {pipeline_mode = #tpu.pipeline_mode<synchronous>, transform_indices = @transform_8, window_bounds = array<i64: 8, 512>}]} {
    %c0 = arith.constant 0 : index
    %c0_0 = arith.constant 0 : index
    %0 = vector.load %arg3[%c0, %c0_0] : memref<8x36xbf16, #tpu.memory_space<vmem>>, vector<8x36xbf16>
    %c0_1 = arith.constant 0 : index
    %c0_2 = arith.constant 0 : index
    %1 = vector.load %arg1[%c0_1, %c0_2] : memref<36x512xbf16, #tpu.memory_space<vmem>>, vector<36x512xbf16>
    %cst = arith.constant dense<0.000000e+00> : vector<8x512xf32>
    %2 = tpu.matmul %0, %1, %cst {dimension_numbers = #tpu.dot_dimension_numbers<[1], [0], [0], [1], [0, 0, 1, 1], [], []>} : vector<8x36xbf16>, vector<36x512xbf16>, vector<8x512xf32> -> vector<8x512xf32>
    %c0_3 = arith.constant 0 : index
    %c0_4 = arith.constant 0 : index
    %3 = vector.load %arg5[%c0_3, %c0_4] : memref<8x1xf32, #tpu.memory_space<vmem>>, vector<8x1xf32>
    %c0_5 = arith.constant 0 : index
    %c0_6 = arith.constant 0 : index
    %4 = vector.load %arg6[%c0_5, %c0_6] : memref<8x1xf32, #tpu.memory_space<vmem>>, vector<8x1xf32>
    %cst_7 = arith.constant dense<0.000000e+00> : vector<8xf32>
    %5 = vector.multi_reduction <add>, %2, %cst_7 [1] : vector<8x512xf32> to vector<8xf32>
    %6 = vector.shape_cast %5 : vector<8xf32> to vector<8x1xf32>
    %cst_8 = arith.constant 5.120000e+02 : f32
    %7 = vector.broadcast %cst_8 : f32 to vector<8x1xf32>
    %8 = arith.divf %6, %7 : vector<8x1xf32>
    %9 = vector.broadcast %8 : vector<8x1xf32> to vector<8x512xf32>
    %10 = arith.subf %2, %9 : vector<8x512xf32>
    %11 = arith.mulf %10, %10 : vector<8x512xf32>
    %cst_9 = arith.constant dense<0.000000e+00> : vector<8xf32>
    %12 = vector.multi_reduction <add>, %11, %cst_9 [1] : vector<8x512xf32> to vector<8xf32>
    %13 = vector.shape_cast %12 : vector<8xf32> to vector<8x1xf32>
    %cst_10 = arith.constant 5.120000e+02 : f32
    %14 = vector.broadcast %cst_10 : f32 to vector<8x1xf32>
    %15 = arith.divf %13, %14 : vector<8x1xf32>
    %cst_11 = arith.constant 9.99999974E-6 : f32
    %16 = vector.broadcast %cst_11 : f32 to vector<8x1xf32>
    %17 = arith.addf %15, %16 : vector<8x1xf32>
    %18 = math.rsqrt %17 : vector<8x1xf32>
    %19 = arith.mulf %3, %18 : vector<8x1xf32>
    %20 = vector.broadcast %19 : vector<8x1xf32> to vector<8x512xf32>
    %21 = arith.mulf %10, %20 : vector<8x512xf32>
    %22 = vector.broadcast %4 : vector<8x1xf32> to vector<8x512xf32>
    %23 = arith.addf %21, %22 : vector<8x512xf32>
    %cst_12 = arith.constant 0.000000e+00 : f32
    %24 = vector.broadcast %cst_12 : f32 to vector<8x512xf32>
    %25 = arith.maximumf %23, %24 : vector<8x512xf32>
    %c17_i32 = arith.constant 17 : i32
    %26 = tpu.dynamic_rotate %25 by %c17_i32 dim 1 : vector<8x512xf32>, i32 -> vector<8x512xf32>
    %c0_13 = arith.constant 0 : index
    %c0_14 = arith.constant 0 : index
    %27 = vector.load %arg2[%c0_13, %c0_14] : memref<9x512xf32, #tpu.memory_space<vmem>>, vector<1x512xf32>
    %28 = vector.broadcast %27 : vector<1x512xf32> to vector<8x512xf32>
    %29 = arith.mulf %26, %28 : vector<8x512xf32>
    %c16_i32 = arith.constant 16 : i32
    %30 = tpu.dynamic_rotate %25 by %c16_i32 dim 1 : vector<8x512xf32>, i32 -> vector<8x512xf32>
    %c1 = arith.constant 1 : index
    %c0_15 = arith.constant 0 : index
    %31 = vector.load %arg2[%c1, %c0_15] : memref<9x512xf32, #tpu.memory_space<vmem>>, vector<1x512xf32>
    %32 = vector.broadcast %31 : vector<1x512xf32> to vector<8x512xf32>
    %33 = arith.mulf %30, %32 : vector<8x512xf32>
    %c15_i32 = arith.constant 15 : i32
    %34 = tpu.dynamic_rotate %25 by %c15_i32 dim 1 : vector<8x512xf32>, i32 -> vector<8x512xf32>
    %c2 = arith.constant 2 : index
    %c0_16 = arith.constant 0 : index
    %35 = vector.load %arg2[%c2, %c0_16] : memref<9x512xf32, #tpu.memory_space<vmem>>, vector<1x512xf32>
    %36 = vector.broadcast %35 : vector<1x512xf32> to vector<8x512xf32>
    %37 = arith.mulf %34, %36 : vector<8x512xf32>
    %c1_i32 = arith.constant 1 : i32
    %38 = tpu.dynamic_rotate %25 by %c1_i32 dim 1 : vector<8x512xf32>, i32 -> vector<8x512xf32>
    %c3 = arith.constant 3 : index
    %c0_17 = arith.constant 0 : index
    %39 = vector.load %arg2[%c3, %c0_17] : memref<9x512xf32, #tpu.memory_space<vmem>>, vector<1x512xf32>
    %40 = vector.broadcast %39 : vector<1x512xf32> to vector<8x512xf32>
    %41 = arith.mulf %38, %40 : vector<8x512xf32>
    %c511_i32 = arith.constant 511 : i32
    %42 = tpu.dynamic_rotate %25 by %c511_i32 dim 1 : vector<8x512xf32>, i32 -> vector<8x512xf32>
    %c5 = arith.constant 5 : index
    %c0_18 = arith.constant 0 : index
    %43 = vector.load %arg2[%c5, %c0_18] : memref<9x512xf32, #tpu.memory_space<vmem>>, vector<1x512xf32>
    %44 = vector.broadcast %43 : vector<1x512xf32> to vector<8x512xf32>
    %45 = arith.mulf %42, %44 : vector<8x512xf32>
    %c497_i32 = arith.constant 497 : i32
    %46 = tpu.dynamic_rotate %25 by %c497_i32 dim 1 : vector<8x512xf32>, i32 -> vector<8x512xf32>
    %c6 = arith.constant 6 : index
    %c0_19 = arith.constant 0 : index
    %47 = vector.load %arg2[%c6, %c0_19] : memref<9x512xf32, #tpu.memory_space<vmem>>, vector<1x512xf32>
    %48 = vector.broadcast %47 : vector<1x512xf32> to vector<8x512xf32>
    %49 = arith.mulf %46, %48 : vector<8x512xf32>
    %c496_i32 = arith.constant 496 : i32
    %50 = tpu.dynamic_rotate %25 by %c496_i32 dim 1 : vector<8x512xf32>, i32 -> vector<8x512xf32>
    %c7 = arith.constant 7 : index
    %c0_20 = arith.constant 0 : index
    %51 = vector.load %arg2[%c7, %c0_20] : memref<9x512xf32, #tpu.memory_space<vmem>>, vector<1x512xf32>
    %52 = vector.broadcast %51 : vector<1x512xf32> to vector<8x512xf32>
    %53 = arith.mulf %50, %52 : vector<8x512xf32>
    %c495_i32 = arith.constant 495 : i32
    %54 = tpu.dynamic_rotate %25 by %c495_i32 dim 1 : vector<8x512xf32>, i32 -> vector<8x512xf32>
    %c8 = arith.constant 8 : index
    %c0_21 = arith.constant 0 : index
    %55 = vector.load %arg2[%c8, %c0_21] : memref<9x512xf32, #tpu.memory_space<vmem>>, vector<1x512xf32>
    %56 = vector.broadcast %55 : vector<1x512xf32> to vector<8x512xf32>
    %57 = arith.mulf %54, %56 : vector<8x512xf32>
    %58 = tpu.concatenate %29, %33, %37, %41, %25, %45, %49, %53, %57 in 0 : vector<8x512xf32>, vector<8x512xf32>, vector<8x512xf32>, vector<8x512xf32>, vector<8x512xf32>, vector<8x512xf32>, vector<8x512xf32>, vector<8x512xf32>, vector<8x512xf32> -> vector<72x512xf32>
    %59 = arith.truncf %58 : vector<72x512xf32> to vector<72x512xbf16>
    %c0_22 = arith.constant 0 : index
    %c0_23 = arith.constant 0 : index
    %60 = vector.load %arg4[%c0_22, %c0_23] : memref<8x72xbf16, #tpu.memory_space<vmem>>, vector<8x72xbf16>
    %cst_24 = arith.constant dense<0.000000e+00> : vector<8x512xf32>
    %61 = tpu.matmul %60, %59, %cst_24 {dimension_numbers = #tpu.dot_dimension_numbers<[1], [0], [0], [1], [0, 0, 1, 1], [], []>} : vector<8x72xbf16>, vector<72x512xbf16>, vector<8x512xf32> -> vector<8x512xf32>
    %c0_25 = arith.constant 0 : index
    %c0_26 = arith.constant 0 : index
    %62 = vector.load %arg7[%c0_25, %c0_26] : memref<8x1xf32, #tpu.memory_space<vmem>>, vector<8x1xf32>
    %c0_27 = arith.constant 0 : index
    %c0_28 = arith.constant 0 : index
    %63 = vector.load %arg8[%c0_27, %c0_28] : memref<8x1xf32, #tpu.memory_space<vmem>>, vector<8x1xf32>
    %cst_29 = arith.constant dense<0.000000e+00> : vector<8xf32>
    %64 = vector.multi_reduction <add>, %61, %cst_29 [1] : vector<8x512xf32> to vector<8xf32>
    %65 = vector.shape_cast %64 : vector<8xf32> to vector<8x1xf32>
    %cst_30 = arith.constant 5.120000e+02 : f32
    %66 = vector.broadcast %cst_30 : f32 to vector<8x1xf32>
    %67 = arith.divf %65, %66 : vector<8x1xf32>
    %68 = vector.broadcast %67 : vector<8x1xf32> to vector<8x512xf32>
    %69 = arith.subf %61, %68 : vector<8x512xf32>
    %70 = arith.mulf %69, %69 : vector<8x512xf32>
    %cst_31 = arith.constant dense<0.000000e+00> : vector<8xf32>
    %71 = vector.multi_reduction <add>, %70, %cst_31 [1] : vector<8x512xf32> to vector<8xf32>
    %72 = vector.shape_cast %71 : vector<8xf32> to vector<8x1xf32>
    %cst_32 = arith.constant 5.120000e+02 : f32
    %73 = vector.broadcast %cst_32 : f32 to vector<8x1xf32>
    %74 = arith.divf %72, %73 : vector<8x1xf32>
    %cst_33 = arith.constant 9.99999974E-6 : f32
    %75 = vector.broadcast %cst_33 : f32 to vector<8x1xf32>
    %76 = arith.addf %74, %75 : vector<8x1xf32>
    %77 = math.rsqrt %76 : vector<8x1xf32>
    %78 = arith.mulf %62, %77 : vector<8x1xf32>
    %79 = vector.broadcast %78 : vector<8x1xf32> to vector<8x512xf32>
    %80 = arith.mulf %69, %79 : vector<8x512xf32>
    %81 = vector.broadcast %63 : vector<8x1xf32> to vector<8x512xf32>
    %82 = arith.addf %80, %81 : vector<8x512xf32>
    %cst_34 = arith.constant 0.000000e+00 : f32
    %83 = vector.broadcast %cst_34 : f32 to vector<8x512xf32>
    %84 = arith.maximumf %82, %83 : vector<8x512xf32>
    %c0_35 = arith.constant 0 : index
    %c0_36 = arith.constant 0 : index
    %85 = vector.load %arg9[%c0_35, %c0_36] : memref<8x512xf32, #tpu.memory_space<vmem>>, vector<8x512xf32>
    tpu.vector_store %arg9[%c0_35, %c0_36], %84 {strides = array<i32>} : memref<8x512xf32, #tpu.memory_space<vmem>>, vector<8x512xf32>,
    return
  }
  func.func @transform_0(%arg0: i32) -> (i32, i32) {
    %c0_i32 = arith.constant 0 : i32
    %c0_i32_0 = arith.constant 0 : i32
    %c0_i32_1 = arith.constant 0 : i32
    return %c0_i32, %c0_i32_0 : i32, i32
  }
  func.func @transform_1(%arg0: i32) -> (i32, i32) {
    %c0_i32 = arith.constant 0 : i32
    %c0_i32_0 = arith.constant 0 : i32
    %c0_i32_1 = arith.constant 0 : i32
    return %c0_i32, %c0_i32_0 : i32, i32
  }
  func.func @transform_2(%arg0: i32) -> (i32, i32) {
    %c0_i32 = arith.constant 0 : i32
    %c0_i32_0 = arith.constant 0 : i32
    %c0_i32_1 = arith.constant 0 : i32
    return %c0_i32, %c0_i32_0 : i32, i32
  }
  func.func @transform_3(%arg0: i32) -> (i32, i32) {
    %c0_i32 = arith.constant 0 : i32
    %c0_i32_0 = arith.constant 0 : i32
    %c0_i32_1 = arith.constant 0 : i32
    return %c0_i32, %c0_i32_0 : i32, i32
  }
  func.func @transform_4(%arg0: i32) -> (i32, i32) {
    %c0_i32 = arith.constant 0 : i32
    %c0_i32_0 = arith.constant 0 : i32
    %c0_i32_1 = arith.constant 0 : i32
    return %c0_i32, %c0_i32_0 : i32, i32
  }
  func.func @transform_5(%arg0: i32) -> (i32, i32) {
    %c0_i32 = arith.constant 0 : i32
    %c0_i32_0 = arith.constant 0 : i32
    %c0_i32_1 = arith.constant 0 : i32
    return %c0_i32, %c0_i32_0 : i32, i32
  }
  func.func @transform_6(%arg0: i32) -> (i32, i32) {
    %c0_i32 = arith.constant 0 : i32
    %c0_i32_0 = arith.constant 0 : i32
    %c0_i32_1 = arith.constant 0 : i32
    return %c0_i32, %c0_i32_0 : i32, i32
  }
  func.func @transform_7(%arg0: i32) -> (i32, i32) {
    %c0_i32 = arith.constant 0 : i32
    %c0_i32_0 = arith.constant 0 : i32
    %c0_i32_1 = arith.constant 0 : i32
    return %c0_i32, %c0_i32_0 : i32, i32
  }
  func.func @transform_8(%arg0: i32) -> (i32, i32) {
    %c0_i32 = arith.constant 0 : i32
    %c0_i32_0 = arith.constant 0 : i32
    %c0_i32_1 = arith.constant 0 : i32
    return %c0_i32, %c0_i32_0 : i32, i32
  }
}

</mosaic_0001>

<llo_original>
// kernel: tpu_custom_call.1
$region0: #{tpu_custom_call.1}
  #allocation0 [shape = 'u32[]', space=smem, size = 0x4, offset = 0x4, fixed_abs, tag = 'smem constant byte address 0x4 - core index']
  #allocation1 [shape = 'u32[72,128]{1,0:T(1,128)}', space=vmem, size = 0x9000, scoped, tag = 'internal scratch']
  %s0 = inlined_call_operand.hbm [shape: bf16[36,512], index: 0, kind: input, shape index: {}]
  %s1 = inlined_call_operand.hbm [shape: f32[9,512], index: 1, kind: input, shape index: {}]
  %s2 = inlined_call_operand.vmem [shape: bf16[8,36], index: 2, kind: input, shape index: {}]
  %s3 = inlined_call_operand.vmem [shape: bf16[8,72], index: 3, kind: input, shape index: {}]
  %s4 = inlined_call_operand.vmem [shape: f32[8,1], index: 4, kind: input, shape index: {}]
  %s5 = inlined_call_operand.vmem [shape: f32[8,1], index: 5, kind: input, shape index: {}]
  %s6 = inlined_call_operand.vmem [shape: f32[8,1], index: 6, kind: input, shape index: {}]
  %s7 = inlined_call_operand.vmem [shape: f32[8,1], index: 7, kind: input, shape index: {}]
  %s8 = inlined_call_operand.hbm [shape: f32[8,512], index: 8, kind: output, shape index: {}]
  %s9 = sld [smem:[#allocation0]]
  $region50: #{tpu_custom_call.1} parent=0
    _
  %s11 = ssub.s32 1, %s9
  %s12 = scalar_select 0, %s11, %s9
  $region1: #{tpu_custom_call.1} parent=0
    #allocation2 [shape = 'u8[40960]{0}', space=vmem, size = 0xa000, scoped, tag = 'input window, operand 0, single buffered']
    #allocation3 [shape = 's32[1]{0}', space=sflag, size = 0x4, scoped, tag = 'scoped memory for tpu_custom_call.1']
    #allocation4 [shape = 's32[1]{0}', space=sflag, size = 0x4, scoped, tag = 'scoped memory for tpu_custom_call.1']
    #allocation5 [shape = 'u8[32768]{0}', space=vmem, size = 0x8000, scoped, tag = 'input window, operand 1, single buffered']
    #allocation6 [shape = 's32[1]{0}', space=sflag, size = 0x4, scoped, tag = 'scoped memory for tpu_custom_call.1']
    #allocation7 [shape = 'u8[16384]{0}', space=vmem, size = 0x4000, scoped, tag = 'output window, operand 0, single buffered']
    %13 = vsyncpa [#allocation3], 0
    %14 = vsyncpa [#allocation6], 0
    %15 = vsyncpa [#allocation4], 0
    // Predicated region
    $region2: #{tpu_custom_call.1} parent=1 // pred_check
      _
    $region3: #{tpu_custom_call.1} parent=1 // pred_check_branch
      %17 = sbr.rel (0) target = $region5
    $region4: #{tpu_custom_call.1} parent=1 // pred_region
      %19 = vsyncadd [#allocation3], 0
      %s20 = sshll.u32 %s0, 4
      %s21 = int_to_ptr.hbm [resolvable:$true] %s20
      %s22 = sshll.u32 [#allocation2], 4
      %s23 = int_to_ptr.vmem [resolvable:$true] %s22
      %28 = dma.hbm_to_vmem [thread:$0]  %s21, 1280, %s23, [#allocation3], 256, 256, 16
    $region5: #{tpu_custom_call.1} parent=1 // pred_fallthru
      _
    // Predicated region
    $region6: #{tpu_custom_call.1} parent=1 // pred_check
      _
    $region7: #{tpu_custom_call.1} parent=1 // pred_check_branch
      %30 = sbr.rel (0) target = $region9
    $region8: #{tpu_custom_call.1} parent=1 // pred_region
      %32 = vsyncadd [#allocation6], 0
      %s33 = sshll.u32 %s1, 4
      %s34 = int_to_ptr.hbm [resolvable:$true] %s33
      %s35 = sshll.u32 [#allocation5], 4
      %s36 = int_to_ptr.vmem [resolvable:$true] %s35
      %41 = dma.hbm_to_vmem [thread:$0]  %s34, 1024, %s36, [#allocation6], 512, 512, 32
    $region9: #{tpu_custom_call.1} parent=1 // pred_fallthru
      _
    // Predicated region
    $region10: #{tpu_custom_call.1} parent=1 // pred_check
      _
    $region11: #{tpu_custom_call.1} parent=1 // pred_check_branch
      %43 = sbr.rel (0) target = $region13
    $region12: #{tpu_custom_call.1} parent=1 // pred_region
      _
    $region13: #{tpu_custom_call.1} parent=1 // pred_fallthru
      _
    // Predicated region
    $region14: #{tpu_custom_call.1} parent=1 // pred_check
      _
    $region15: #{tpu_custom_call.1} parent=1 // pred_check_branch
      %45 = sbr.rel (0) target = $region17
    $region16: #{tpu_custom_call.1} parent=1 // pred_region
      _
    $region17: #{tpu_custom_call.1} parent=1 // pred_fallthru
      _
    // Predicated region
    $region18: #{tpu_custom_call.1} parent=1 // pred_check
      _
    $region19: #{tpu_custom_call.1} parent=1 // pred_check_branch
      %47 = sbr.rel (0) target = $region21
    $region20: #{tpu_custom_call.1} parent=1 // pred_region
      _
    $region21: #{tpu_custom_call.1} parent=1 // pred_fallthru
      _
    // Predicated region
    $region22: #{tpu_custom_call.1} parent=1 // pred_check
      _
    $region23: #{tpu_custom_call.1} parent=1 // pred_check_branch
      %49 = sbr.rel (0) target = $region25
    $region24: #{tpu_custom_call.1} parent=1 // pred_region
      _
    $region25: #{tpu_custom_call.1} parent=1 // pred_fallthru
      _
    // Predicated region
    $region26: #{tpu_custom_call.1} parent=1 // pred_check
      _
    $region27: #{tpu_custom_call.1} parent=1 // pred_check_branch
      %51 = sbr.rel (0) target = $region29
    $region28: #{tpu_custom_call.1} parent=1 // pred_region
      _
    $region29: #{tpu_custom_call.1} parent=1 // pred_fallthru
      _
    // Predicated region
    $region30: #{tpu_custom_call.1} parent=1 // pred_check
      _
    $region31: #{tpu_custom_call.1} parent=1 // pred_check_branch
      %53 = sbr.rel (0) target = $region33
    $region32: #{tpu_custom_call.1} parent=1 // pred_region
      _
    $region33: #{tpu_custom_call.1} parent=1 // pred_fallthru
      _
    // Predicated region
    $region34: #{tpu_custom_call.1} parent=1 // pred_check
      _
    $region35: #{tpu_custom_call.1} parent=1 // pred_check_branch
      %55 = sbr.rel (0) target = $region37
    $region36: #{tpu_custom_call.1} parent=1 // pred_region
      %57 = dma.done [#allocation3], 1280
    $region37: #{tpu_custom_call.1} parent=1 // pred_fallthru
      _
    // Predicated region
    $region38: #{tpu_custom_call.1} parent=1 // pred_check
      _
    $region39: #{tpu_custom_call.1} parent=1 // pred_check_branch
      %59 = sbr.rel (0) target = $region41
    $region40: #{tpu_custom_call.1} parent=1 // pred_region
      %61 = dma.done [#allocation6], 1024
    $region41: #{tpu_custom_call.1} parent=1 // pred_fallthru
      _
    %v63 = vld [vmem:[%s2] sm:$0xf]
    %v64 = vld [vmem:[#allocation2] sm:$0xff]
    %v65 = vld [vmem:[#allocation2 + $0x8] sm:$0xff]
    %v66 = vld [vmem:[#allocation2 + $0x10] sm:$0xff]
    %v67 = vld [vmem:[#allocation2 + $0x18] sm:$0xff]
    %v68 = vld [vmem:[#allocation2 + $0x20] sm:$0xff]
    %v69 = vld [vmem:[#allocation2 + $0x28] sm:$0xff]
    %v70 = vld [vmem:[#allocation2 + $0x30] sm:$0xff]
    %v71 = vld [vmem:[#allocation2 + $0x38] sm:$0xff]
    %v72 = vld [vmem:[#allocation2 + $0x40] sm:$0x33]
    %v73 = vld [vmem:[#allocation2 + $0x48] sm:$0x33]
    %v84 = vunpack.c.l.b16 %v64
    %v85 = vunpack.c.h.b16 %v64
    %v86 = vunpack.c.l.b16 %v65
    %v87 = vunpack.c.h.b16 %v65
    %v88 = vunpack.c.l.b16 %v66
    %v89 = vunpack.c.h.b16 %v66
    %v90 = vunpack.c.l.b16 %v67
    %v91 = vunpack.c.h.b16 %v67
    %v92 = vunpack.c.l.b16 %v68
    %v93 = vunpack.c.h.b16 %v68
    %v94 = vunpack.c.l.b16 %v69
    %v95 = vunpack.c.h.b16 %v69
    %v96 = vunpack.c.l.b16 %v70
    %v97 = vunpack.c.h.b16 %v70
    %v98 = vunpack.c.l.b16 %v71
    %v99 = vunpack.c.h.b16 %v71
    %v100 = vunpack.c.l.b16 %v72
    %v101 = vunpack.c.h.b16 %v72
    %v102 = vunpack.c.l.b16 %v73
    %v103 = vunpack.c.h.b16 %v73
    %v104 = vpack.c.b16 %v88, %v84
    %v105 = vpack.c.b16 %v89, %v85
    %v106 = vpack.c.b16 %v90, %v86
    %v107 = vpack.c.b16 %v91, %v87
    %v108 = vpack.c.b16 %v96, %v92
    %v109 = vpack.c.b16 %v97, %v93
    %v110 = vpack.c.b16 %v98, %v94
    %v111 = vpack.c.b16 %v99, %v95
    %v112 = vpack.c.b16 %v100, %v100
    %v113 = vpack.c.b16 %v101, %v101
    %v114 = vpack.c.b16 %v102, %v102
    %v115 = vpack.c.b16 %v103, %v103
    %vm124 = vcmask 293888
    %v126 = vsel %vm124, %v63, 0
    %vm128 = vcmask 1041408
    %v130 = vsel %vm128, %v112, 0
    %v133 = vsel %vm128, %v113, 0
    %v136 = vsel %vm128, %v114, 0
    %v139 = vsel %vm128, %v115, 0
    %141 = vmatpush.bf16.msra.mxu0 0
    %142 = vmatpush.bf16.msra.mxu0 0
    %143 = vmatpush.bf16.msra.mxu0 0
    %144 = vmatpush.bf16.msra.mxu0 0
    %145 = vmatpush.bf16.msra.mxu0 0
    %146 = vmatpush.bf16.msra.mxu0 %v130
    %147 = vmatpush.bf16.msra.mxu0 %v108
    %148 = vmatpush.bf16.msra.mxu0 %v104
    %149 = vmatmul.bf16.gmra.mxu0 %v126
    %v150 = vpop.f32.mrf.mxu0
    %v151 = vadd.f32 0.0, %v150
    %v152 = vpop.f32.mrf.mxu0
    %153 = vdwg.mxu0
    %154 = vmatpush.bf16.msra.mxu0 0
    %155 = vmatpush.bf16.msra.mxu0 0
    %156 = vmatpush.bf16.msra.mxu0 0
    %157 = vmatpush.bf16.msra.mxu0 0
    %158 = vmatpush.bf16.msra.mxu0 0
    %159 = vmatpush.bf16.msra.mxu0 %v133
    %160 = vmatpush.bf16.msra.mxu0 %v109
    %161 = vmatpush.bf16.msra.mxu0 %v105
    %162 = vmatmul.bf16.gmra.mxu0 %v126
    %v163 = vpop.f32.mrf.mxu0
    %v164 = vadd.f32 0.0, %v163
    %v165 = vpop.f32.mrf.mxu0
    %166 = vdwg.mxu0
    %167 = vmatpush.bf16.msra.mxu0 0
    %168 = vmatpush.bf16.msra.mxu0 0
    %169 = vmatpush.bf16.msra.mxu0 0
    %170 = vmatpush.bf16.msra.mxu0 0
    %171 = vmatpush.bf16.msra.mxu0 0
    %172 = vmatpush.bf16.msra.mxu0 %v136
    %173 = vmatpush.bf16.msra.mxu0 %v110
    %174 = vmatpush.bf16.msra.mxu0 %v106
    %175 = vmatmul.bf16.gmra.mxu0 %v126
    %v176 = vpop.f32.mrf.mxu0
    %v177 = vadd.f32 0.0, %v176
    %v178 = vpop.f32.mrf.mxu0
    %179 = vdwg.mxu0
    %180 = vmatpush.bf16.msra.mxu0 0
    %181 = vmatpush.bf16.msra.mxu0 0
    %182 = vmatpush.bf16.msra.mxu0 0
    %183 = vmatpush.bf16.msra.mxu0 0
    %184 = vmatpush.bf16.msra.mxu0 0
    %185 = vmatpush.bf16.msra.mxu0 %v139
    %186 = vmatpush.bf16.msra.mxu0 %v111
    %187 = vmatpush.bf16.msra.mxu0 %v107
    %188 = vmatmul.bf16.gmra.mxu0 %v126
    %v189 = vpop.f32.mrf.mxu0
    %v190 = vadd.f32 0.0, %v189
    %v191 = vpop.f32.mrf.mxu0
    %192 = vdwg.mxu0
    %v193 = vld [vmem:[%s4] sm:$0xff]
    %v194 = vld [vmem:[%s5] sm:$0xff]
    %v195 = vadd.f32 %v151, %v164
    %v196 = vadd.f32 %v195, %v177
    %v197 = vadd.f32 %v196, %v190
    %198 = vadd.xlane.f32.xlu0 %v197
    %v199 = vpop.xlane.xlu0 %198
    %v200 = vrcp.pop 512.0
    %v201 = vmul.f32 512.0, %v200
    %v202 = vsub.f32 1.0, %v201
    %v203 = vmul.f32 %v200, %v202
    %v204 = vadd.f32 %v200, %v203
    %vm205 = vweird.f32 %v200
    %v206 = vsel %vm205, %v200, %v204
    %v207 = vmul.f32 %v199, %v206
    %v208 = vsub.f32 %v151, %v207
    %v209 = vsub.f32 %v164, %v207
    %v210 = vsub.f32 %v177, %v207
    %v211 = vsub.f32 %v190, %v207
    %v212 = vmul.f32 %v208, %v208
    %v213 = vmul.f32 %v209, %v209
    %v214 = vmul.f32 %v210, %v210
    %v215 = vmul.f32 %v211, %v211
    %v216 = vadd.f32 %v212, %v213
    %v217 = vadd.f32 %v216, %v214
    %v218 = vadd.f32 %v217, %v215
    %219 = vadd.xlane.f32.xlu0 %v218
    %v220 = vpop.xlane.xlu0 %219
    %v221 = vmul.f32 %v220, %v206
    %v222 = vadd.f32 %v221, 1e-05
    %v223 = vrsqrt.pop %v222
    %v224 = vmul.f32 %v223, %v222
    %v225 = vmul.f32 %v224, %v223
    %v226 = vmul.f32 0.5, %v225
    %v227 = vsub.f32 1.5, %v226
    %v228 = vmul.f32 %v223, %v227
    %vm229 = vweird.f32 %v222
    %vm230 = vweird.f32 %v223
    %vm231 = vmor %vm229, %vm230
    %v232 = vsel %vm231, %v223, %v228
    %v233 = vmul.f32 %v193, %v232
    %235 = vset.pattern.permute.xlu0 0
    %236 = vperm.xlu0 %235, %v233
    %v237 = vpop.permute.xlu0 %236
    %v239 = vmul.f32 %v208, %v237
    %v240 = vmul.f32 %v209, %v237
    %v241 = vmul.f32 %v210, %v237
    %v242 = vmul.f32 %v211, %v237
    %244 = vset.pattern.permute.xlu0 0
    %245 = vperm.xlu0 %244, %v194
    %v246 = vpop.permute.xlu0 %245
    %v248 = vadd.f32 %v239, %v246
    %v249 = vadd.f32 %v240, %v246
    %v250 = vadd.f32 %v241, %v246
    %v251 = vadd.f32 %v242, %v246
    %v252 = vmax.f32 %v248, 0.0
    %v253 = vmax.f32 %v249, 0.0
    %v254 = vmax.f32 %v250, 0.0
    %v255 = vmax.f32 %v251, 0.0
    %256 = vrot.lane.b32.xlu0 %v252, 17
    %v257 = vpop.permute.xlu0 %256
    %258 = vrot.lane.b32.xlu0 %v253, 17
    %v259 = vpop.permute.xlu0 %258
    %260 = vrot.lane.b32.xlu0 %v254, 17
    %v261 = vpop.permute.xlu0 %260
    %262 = vrot.lane.b32.xlu0 %v255, 17
    %v263 = vpop.permute.xlu0 %262
    %v264 = vlaneseq
    %v265 = vand.u32 %v264, 127
    %vm266 = vcmp.lt.s32.totalorder %v265, 17
    %v267 = vsel %vm266, %v261, %v263
    %v268 = vsel %vm266, %v259, %v261
    %v269 = vsel %vm266, %v257, %v259
    %v270 = vsel %vm266, %v263, %v257
    %v271 = vld [vmem:[#allocation5] ss:$8 sm:$0xf]
    %v273 = vperm.slane %v271, 0
    %v274 = vperm.slane %v271, 1
    %v275 = vperm.slane %v271, 2
    %v276 = vperm.slane %v271, 3
    %v281 = vmul.f32 %v270, %v273
    %v282 = vmul.f32 %v269, %v274
    %v283 = vmul.f32 %v268, %v275
    %v284 = vmul.f32 %v267, %v276
    %285 = vrot.lane.b32.xlu0 %v252, 16
    %v286 = vpop.permute.xlu0 %285
    %287 = vrot.lane.b32.xlu0 %v253, 16
    %v288 = vpop.permute.xlu0 %287
    %289 = vrot.lane.b32.xlu0 %v254, 16
    %v290 = vpop.permute.xlu0 %289
    %291 = vrot.lane.b32.xlu0 %v255, 16
    %v292 = vpop.permute.xlu0 %291
    %vm293 = vcmp.lt.s32.totalorder %v265, 16
    %v294 = vsel %vm293, %v290, %v292
    %v295 = vsel %vm293, %v288, %v290
    %v296 = vsel %vm293, %v286, %v288
    %v297 = vsel %vm293, %v292, %v286
    %s298 = scalar_lea.vmem [#allocation5], 1
    %v299 = vld [vmem:[%s298] ss:$8 sm:$0xf]
    %v301 = vperm.slane %v299, 0
    %v302 = vperm.slane %v299, 1
    %v303 = vperm.slane %v299, 2
    %v304 = vperm.slane %v299, 3
    %v309 = vmul.f32 %v297, %v301
    %v310 = vmul.f32 %v296, %v302
    %v311 = vmul.f32 %v295, %v303
    %v312 = vmul.f32 %v294, %v304
    %313 = vrot.lane.b32.xlu0 %v252, 15
    %v314 = vpop.permute.xlu0 %313
    %315 = vrot.lane.b32.xlu0 %v253, 15
    %v316 = vpop.permute.xlu0 %315
    %317 = vrot.lane.b32.xlu0 %v254, 15
    %v318 = vpop.permute.xlu0 %317
    %319 = vrot.lane.b32.xlu0 %v255, 15
    %v320 = vpop.permute.xlu0 %319
    %vm321 = vcmp.lt.s32.totalorder %v265, 15
    %v322 = vsel %vm321, %v318, %v320
    %v323 = vsel %vm321, %v316, %v318
    %v324 = vsel %vm321, %v314, %v316
    %v325 = vsel %vm321, %v320, %v314
    %s326 = scalar_lea.vmem [#allocation5], 2
    %v327 = vld [vmem:[%s326] ss:$8 sm:$0xf]
    %v329 = vperm.slane %v327, 0
    %v330 = vperm.slane %v327, 1
    %v331 = vperm.slane %v327, 2
    %v332 = vperm.slane %v327, 3
    %v337 = vmul.f32 %v325, %v329
    %v338 = vmul.f32 %v324, %v330
    %v339 = vmul.f32 %v323, %v331
    %v340 = vmul.f32 %v322, %v332
    %341 = vrot.lane.b32.xlu0 %v252, 1
    %v342 = vpop.permute.xlu0 %341
    %343 = vrot.lane.b32.xlu0 %v253, 1
    %v344 = vpop.permute.xlu0 %343
    %345 = vrot.lane.b32.xlu0 %v254, 1
    %v346 = vpop.permute.xlu0 %345
    %347 = vrot.lane.b32.xlu0 %v255, 1
    %v348 = vpop.permute.xlu0 %347
    %vm349 = vcmp.lt.s32.totalorder %v265, 1
    %v350 = vsel %vm349, %v346, %v348
    %v351 = vsel %vm349, %v344, %v346
    %v352 = vsel %vm349, %v342, %v344
    %v353 = vsel %vm349, %v348, %v342
    %s354 = scalar_lea.vmem [#allocation5], 3
    %v355 = vld [vmem:[%s354] ss:$8 sm:$0xf]
    %v357 = vperm.slane %v355, 0
    %v358 = vperm.slane %v355, 1
    %v359 = vperm.slane %v355, 2
    %v360 = vperm.slane %v355, 3
    %v365 = vmul.f32 %v353, %v357
    %v366 = vmul.f32 %v352, %v358
    %v367 = vmul.f32 %v351, %v359
    %v368 = vmul.f32 %v350, %v360
    %369 = vrot.lane.b32.xlu0 %v252, 127
    %v370 = vpop.permute.xlu0 %369
    %371 = vrot.lane.b32.xlu0 %v253, 127
    %v372 = vpop.permute.xlu0 %371
    %373 = vrot.lane.b32.xlu0 %v254, 127
    %v374 = vpop.permute.xlu0 %373
    %375 = vrot.lane.b32.xlu0 %v255, 127
    %v376 = vpop.permute.xlu0 %375
    %vm377 = vcmp.lt.s32.totalorder %v265, 127
    %v378 = vsel %vm377, %v374, %v376
    %v379 = vsel %vm377, %v372, %v374
    %v380 = vsel %vm377, %v370, %v372
    %v381 = vsel %vm377, %v376, %v370
    %s382 = scalar_lea.vmem [#allocation5], 5
    %v383 = vld [vmem:[%s382] ss:$8 sm:$0xf]
    %v385 = vperm.slane %v383, 0
    %v386 = vperm.slane %v383, 1
    %v387 = vperm.slane %v383, 2
    %v388 = vperm.slane %v383, 3
    %v393 = vmul.f32 %v380, %v385
    %v394 = vmul.f32 %v379, %v386
    %v395 = vmul.f32 %v378, %v387
    %v396 = vmul.f32 %v381, %v388
    %397 = vrot.lane.b32.xlu0 %v252, 113
    %v398 = vpop.permute.xlu0 %397
    %399 = vrot.lane.b32.xlu0 %v253, 113
    %v400 = vpop.permute.xlu0 %399
    %401 = vrot.lane.b32.xlu0 %v254, 113
    %v402 = vpop.permute.xlu0 %401
    %403 = vrot.lane.b32.xlu0 %v255, 113
    %v404 = vpop.permute.xlu0 %403
    %vm405 = vcmp.lt.s32.totalorder %v265, 113
    %v406 = vsel %vm405, %v402, %v404
    %v407 = vsel %vm405, %v400, %v402
    %v408 = vsel %vm405, %v398, %v400
    %v409 = vsel %vm405, %v404, %v398
    %s410 = scalar_lea.vmem [#allocation5], 6
    %v411 = vld [vmem:[%s410] ss:$8 sm:$0xf]
    %v413 = vperm.slane %v411, 0
    %v414 = vperm.slane %v411, 1
    %v415 = vperm.slane %v411, 2
    %v416 = vperm.slane %v411, 3
    %v421 = vmul.f32 %v408, %v413
    %v422 = vmul.f32 %v407, %v414
    %v423 = vmul.f32 %v406, %v415
    %v424 = vmul.f32 %v409, %v416
    %425 = vrot.lane.b32.xlu0 %v252, 112
    %v426 = vpop.permute.xlu0 %425
    %427 = vrot.lane.b32.xlu0 %v253, 112
    %v428 = vpop.permute.xlu0 %427
    %429 = vrot.lane.b32.xlu0 %v254, 112
    %v430 = vpop.permute.xlu0 %429
    %431 = vrot.lane.b32.xlu0 %v255, 112
    %v432 = vpop.permute.xlu0 %431
    %vm433 = vcmp.lt.s32.totalorder %v265, 112
    %v434 = vsel %vm433, %v430, %v432
    %v435 = vsel %vm433, %v428, %v430
    %v436 = vsel %vm433, %v426, %v428
    %v437 = vsel %vm433, %v432, %v426
    %s438 = scalar_lea.vmem [#allocation5], 7
    %v439 = vld [vmem:[%s438] ss:$8 sm:$0xf]
    %v441 = vperm.slane %v439, 0
    %v442 = vperm.slane %v439, 1
    %v443 = vperm.slane %v439, 2
    %v444 = vperm.slane %v439, 3
    %v449 = vmul.f32 %v436, %v441
    %v450 = vmul.f32 %v435, %v442
    %v451 = vmul.f32 %v434, %v443
    %v452 = vmul.f32 %v437, %v444
    %453 = vrot.lane.b32.xlu0 %v252, 111
    %v454 = vpop.permute.xlu0 %453
    %455 = vrot.lane.b32.xlu0 %v253, 111
    %v456 = vpop.permute.xlu0 %455
    %457 = vrot.lane.b32.xlu0 %v254, 111
    %v458 = vpop.permute.xlu0 %457
    %459 = vrot.lane.b32.xlu0 %v255, 111
    %v460 = vpop.permute.xlu0 %459
    %vm461 = vcmp.lt.s32.totalorder %v265, 111
    %v462 = vsel %vm461, %v458, %v460
    %v463 = vsel %vm461, %v456, %v458
    %v464 = vsel %vm461, %v454, %v456
    %v465 = vsel %vm461, %v460, %v454
    %s466 = scalar_lea.vmem [#allocation5], 32
    %v467 = vld [vmem:[%s466] ss:$8 sm:$0xf]
    %v469 = vperm.slane %v467, 0
    %v470 = vperm.slane %v467, 1
    %v471 = vperm.slane %v467, 2
    %v472 = vperm.slane %v467, 3
    %v477 = vmul.f32 %v464, %v469
    %v478 = vmul.f32 %v463, %v470
    %v479 = vmul.f32 %v462, %v471
    %v480 = vmul.f32 %v465, %v472
    %v481 = vpack.c.bf16 %v309, %v281
    %v482 = vpack.c.bf16 %v310, %v282
    %v483 = vpack.c.bf16 %v311, %v283
    %v484 = vpack.c.bf16 %v312, %v284
    %v485 = vpack.c.bf16 %v365, %v337
    %v486 = vpack.c.bf16 %v366, %v338
    %v487 = vpack.c.bf16 %v367, %v339
    %v488 = vpack.c.bf16 %v368, %v340
    %v489 = vpack.c.bf16 %v393, %v252
    %v490 = vpack.c.bf16 %v394, %v253
    %v491 = vpack.c.bf16 %v395, %v254
    %v492 = vpack.c.bf16 %v396, %v255
    %v493 = vpack.c.bf16 %v449, %v421
    %v494 = vpack.c.bf16 %v450, %v422
    %v495 = vpack.c.bf16 %v451, %v423
    %v496 = vpack.c.bf16 %v452, %v424
    %v497 = vpack.c.bf16 %v477, %v477
    %v498 = vpack.c.bf16 %v478, %v478
    %v499 = vpack.c.bf16 %v479, %v479
    %v500 = vpack.c.bf16 %v480, %v480
    %v501 = vld [vmem:[%s3] sm:$0xf]
    %vm502 = vcmask 588800
    %v504 = vsel %vm502, %v501, 0
    %vm506 = vcmask 1043456
    %v508 = vsel %vm506, %v497, 0
    %v511 = vsel %vm506, %v498, 0
    %v514 = vsel %vm506, %v499, 0
    %v517 = vsel %vm506, %v500, 0
    %519 = vmatpush.bf16.msra.mxu0 0
    %520 = vmatpush.bf16.msra.mxu0 0
    %521 = vmatpush.bf16.msra.mxu0 0
    %522 = vmatpush.bf16.msra.mxu0 %v508
    %523 = vmatpush.bf16.msra.mxu0 %v493
    %524 = vmatpush.bf16.msra.mxu0 %v489
    %525 = vmatpush.bf16.msra.mxu0 %v485
    %526 = vmatpush.bf16.msra.mxu0 %v481
    %527 = vmatmul.bf16.gmra.mxu0 %v504
    %v528 = vpop.f32.mrf.mxu0
    %v529 = vadd.f32 0.0, %v528
    %v530 = vpop.f32.mrf.mxu0
    %531 = vdwg.mxu0
    %532 = vmatpush.bf16.msra.mxu0 0
    %533 = vmatpush.bf16.msra.mxu0 0
    %534 = vmatpush.bf16.msra.mxu0 0
    %535 = vmatpush.bf16.msra.mxu0 %v511
    %536 = vmatpush.bf16.msra.mxu0 %v494
    %537 = vmatpush.bf16.msra.mxu0 %v490
    %538 = vmatpush.bf16.msra.mxu0 %v486
    %539 = vmatpush.bf16.msra.mxu0 %v482
    %540 = vmatmul.bf16.gmra.mxu0 %v504
    %v541 = vpop.f32.mrf.mxu0
    %v542 = vadd.f32 0.0, %v541
    %v543 = vpop.f32.mrf.mxu0
    %544 = vdwg.mxu0
    %545 = vmatpush.bf16.msra.mxu0 0
    %546 = vmatpush.bf16.msra.mxu0 0
    %547 = vmatpush.bf16.msra.mxu0 0
    %548 = vmatpush.bf16.msra.mxu0 %v514
    %549 = vmatpush.bf16.msra.mxu0 %v495
    %550 = vmatpush.bf16.msra.mxu0 %v491
    %551 = vmatpush.bf16.msra.mxu0 %v487
    %552 = vmatpush.bf16.msra.mxu0 %v483
    %553 = vmatmul.bf16.gmra.mxu0 %v504
    %v554 = vpop.f32.mrf.mxu0
    %v555 = vadd.f32 0.0, %v554
    %v556 = vpop.f32.mrf.mxu0
    %557 = vdwg.mxu0
    %558 = vmatpush.bf16.msra.mxu0 0
    %559 = vmatpush.bf16.msra.mxu0 0
    %560 = vmatpush.bf16.msra.mxu0 0
    %561 = vmatpush.bf16.msra.mxu0 %v517
    %562 = vmatpush.bf16.msra.mxu0 %v496
    %563 = vmatpush.bf16.msra.mxu0 %v492
    %564 = vmatpush.bf16.msra.mxu0 %v488
    %565 = vmatpush.bf16.msra.mxu0 %v484
    %566 = vmatmul.bf16.gmra.mxu0 %v504
    %v567 = vpop.f32.mrf.mxu0
    %v568 = vadd.f32 0.0, %v567
    %v569 = vpop.f32.mrf.mxu0
    %570 = vdwg.mxu0
    %v571 = vld [vmem:[%s6] sm:$0xff]
    %v572 = vld [vmem:[%s7] sm:$0xff]
    %v573 = vadd.f32 %v529, %v542
    %v574 = vadd.f32 %v573, %v555
    %v575 = vadd.f32 %v574, %v568
    %576 = vadd.xlane.f32.xlu0 %v575
    %v577 = vpop.xlane.xlu0 %576
    %v578 = vmul.f32 %v577, %v206
    %v579 = vsub.f32 %v529, %v578
    %v580 = vsub.f32 %v542, %v578
    %v581 = vsub.f32 %v555, %v578
    %v582 = vsub.f32 %v568, %v578
    %v583 = vmul.f32 %v579, %v579
    %v584 = vmul.f32 %v580, %v580
    %v585 = vmul.f32 %v581, %v581
    %v586 = vmul.f32 %v582, %v582
    %v587 = vadd.f32 %v583, %v584
    %v588 = vadd.f32 %v587, %v585
    %v589 = vadd.f32 %v588, %v586
    %590 = vadd.xlane.f32.xlu0 %v589
    %v591 = vpop.xlane.xlu0 %590
    %v592 = vmul.f32 %v591, %v206
    %v593 = vadd.f32 %v592, 1e-05
    %v594 = vrsqrt.pop %v593
    %v595 = vmul.f32 %v594, %v593
    %v596 = vmul.f32 %v595, %v594
    %v597 = vmul.f32 0.5, %v596
    %v598 = vsub.f32 1.5, %v597
    %v599 = vmul.f32 %v594, %v598
    %vm600 = vweird.f32 %v593
    %vm601 = vweird.f32 %v594
    %vm602 = vmor %vm600, %vm601
    %v603 = vsel %vm602, %v594, %v599
    %v604 = vmul.f32 %v571, %v603
    %606 = vset.pattern.permute.xlu0 0
    %607 = vperm.xlu0 %606, %v604
    %v608 = vpop.permute.xlu0 %607
    %v610 = vmul.f32 %v579, %v608
    %v611 = vmul.f32 %v580, %v608
    %v612 = vmul.f32 %v581, %v608
    %v613 = vmul.f32 %v582, %v608
    %615 = vset.pattern.permute.xlu0 0
    %616 = vperm.xlu0 %615, %v572
    %v617 = vpop.permute.xlu0 %616
    %v619 = vadd.f32 %v610, %v617
    %v620 = vadd.f32 %v611, %v617
    %v621 = vadd.f32 %v612, %v617
    %v622 = vadd.f32 %v613, %v617
    %v623 = vmax.f32 %v619, 0.0
    %v624 = vmax.f32 %v620, 0.0
    %v625 = vmax.f32 %v621, 0.0
    %v626 = vmax.f32 %v622, 0.0
    %627 = vst [vmem:[#allocation7] sm:$0xff] %v623
    %628 = vst [vmem:[#allocation7 + $0x8] sm:$0xff] %v624
    %629 = vst [vmem:[#allocation7 + $0x10] sm:$0xff] %v625
    %630 = vst [vmem:[#allocation7 + $0x18] sm:$0xff] %v626
    // Predicated region
    $region42: #{tpu_custom_call.1} parent=1 // pred_check
      _
    $region43: #{tpu_custom_call.1} parent=1 // pred_check_branch
      %632 = sbr.rel (0) target = $region45
    $region44: #{tpu_custom_call.1} parent=1 // pred_region
      %634 = vsyncadd [#allocation4], 0
      %s636 = sshll.u32 [#allocation7], 4
      %s637 = int_to_ptr.vmem [resolvable:$true] %s636
      %s638 = sshll.u32 %s8, 4
      %s639 = int_to_ptr.hbm [resolvable:$true] %s638
      %641 = dma.vmem_to_hbm [thread:$0]  %s637, 512, %s639, [#allocation4]
    $region45: #{tpu_custom_call.1} parent=1 // pred_fallthru
      _
    // Predicated region
    $region46: #{tpu_custom_call.1} parent=1 // pred_check
      _
    $region47: #{tpu_custom_call.1} parent=1 // pred_check_branch
      %643 = sbr.rel (0) target = $region49
    $region48: #{tpu_custom_call.1} parent=1 // pred_region
      %645 = dma.done [#allocation4], 512
    $region49: #{tpu_custom_call.1} parent=1 // pred_fallthru
      _
    %646 = vsyncpa [#allocation3], 1
    %647 = vsyncpa [#allocation6], 1
    %648 = vsyncpa [#allocation4], 1

</llo_original>
